<compile_context>
chip_gen: v6e
topology: v6e:2x2x1
jax: 0.10.0
libtpu: 0.0.40
codegen_flags: <defaults>
</compile_context>

<pallas_src>
import jax
import jax.numpy as jnp
import numpy as np
from jax.experimental import pallas as pl
from jax.experimental.pallas import tpu as pltpu


def _make_elman_kernel(T, Bp, E, H, Op):
    """Build the kernel with static shape parameters baked in."""

    def elman_kernel(x_ref, w1x_ref, w1h_ref, b1_ref, w2_ref, b2_ref,
                     y_ref, hN_ref, hall_ref):
        # x_ref   : (T*Bp, E)   time-major, batch-padded, row = t*Bp + b
        # w1x_ref : (E, H)      lin1 weight, input part   (pre-transposed)
        # w1h_ref : (H, H)      lin1 weight, hidden part  (pre-transposed)
        # b1_ref  : (1, H)
        # w2_ref  : (H, Op)     lin2 weight (pre-transposed, lane-padded)
        # b2_ref  : (1, Op)
        # y_ref   : (T*Bp, Op)  outputs for all timesteps (lane-dense)
        # hN_ref  : (Bp, H)     final hidden state
        # hall_ref: (T*Bp, H)   f32 scratch holding every h_t

        # ---- Phase 1: input projection for ALL timesteps, one MXU matmul ----
        pre_x = (jnp.dot(x_ref[...], w1x_ref[...],
                         preferred_element_type=jnp.float32)
                 + b1_ref[...])                      # (T*Bp, H), f32

        w1h = w1h_ref[...]                           # hoisted, loop-invariant

        # ---- Phase 2: serial recurrence (only h @ W1h + tanh on the path) ----
        h = jnp.zeros((Bp, H), jnp.float32)
        for t in range(T):                           # static T -> fully unrolled
            pre_t = pre_x[t * Bp:(t + 1) * Bp, :]    # static, sublane-aligned
            h = jnp.tanh(pre_t +
                         jnp.dot(h, w1h, preferred_element_type=jnp.float32))
            hall_ref[t * Bp:(t + 1) * Bp, :] = h

        # ---- Phase 3: output projection for ALL timesteps, one matmul ----
        # Op is a multiple of 128 -> unmasked, lane-full stores to y_ref.
        y = (jnp.dot(hall_ref[...], w2_ref[...],
                     preferred_element_type=jnp.float32)
             + b2_ref[...])                          # (T*Bp, Op)
        y_ref[...] = y.astype(y_ref.dtype)
        hN_ref[...] = h.astype(hN_ref.dtype)

    return elman_kernel


def elman_forward(x_btE, w1, b1, w2, b2, hsize, compute_dtype=jnp.float32):
    """x_btE: (B, T, E) float32.  w1: (H, E+H), b1: (H,), w2: (O, H), b2: (O,)
    (PyTorch nn.Linear layout).  Returns (outputs (B, T, O), hidden (B, H))."""
    B, T, E = x_btE.shape
    H = hsize
    O = w2.shape[0]

    # Pad batch to a sublane multiple (>= 8).
    Bp = max(8, ((B + 7) // 8) * 8)
    # Pad output features to a lane multiple (128) for unmasked stores.
    Op = max(128, ((O + 127) // 128) * 128)

    # Split/transpose weights so the kernel does row-vector @ matrix matmuls.
    w1x = jnp.transpose(w1[:, :E]).astype(compute_dtype)           # (E, H)
    w1h = jnp.transpose(w1[:, E:]).astype(compute_dtype)           # (H, H)
    w2t = jnp.zeros((H, Op), compute_dtype).at[:, :O].set(
        jnp.transpose(w2).astype(compute_dtype))                   # (H, Op)
    b1r = b1.reshape(1, H).astype(jnp.float32)                     # (1, H)
    b2r = jnp.zeros((1, Op), jnp.float32).at[:, :O].set(
        b2.reshape(1, O).astype(jnp.float32))                      # (1, Op)

    # Time-major, batch padded and flattened: row index = t*Bp + b.
    x_tbe = jnp.transpose(x_btE, (1, 0, 2))                        # (T, B, E)
    x_tbe = jnp.pad(x_tbe, ((0, 0), (0, Bp - B), (0, 0)))          # (T, Bp, E)
    x2d = x_tbe.reshape(T * Bp, E).astype(compute_dtype)

    kernel = _make_elman_kernel(T, Bp, E, H, Op)

    # Whole-array VMEM residency, no grid -> single invocation, no
    # double-buffering / pipeline bookkeeping.
    vmem_spec = lambda: pl.BlockSpec(memory_space=pltpu.MemorySpace.VMEM)

    y2d, h_final = pl.pallas_call(
        kernel,
        out_shape=(jax.ShapeDtypeStruct((T * Bp, Op), jnp.float32),
                   jax.ShapeDtypeStruct((Bp, H), jnp.float32)),
        in_specs=[vmem_spec() for _ in range(6)],
        out_specs=(vmem_spec(), vmem_spec()),
        scratch_shapes=[pltpu.VMEM((T * Bp, H), jnp.float32)],
    )(x2d, w1x, w1h, b1r, w2t, b2r)

    # Drop lane/batch padding, back to PyTorch (B, T, O) layout.
    y = y2d[:, :O].reshape(T, Bp, O)[:, :B, :]
    return jnp.transpose(y, (1, 0, 2)), h_final[:B]


def elman_reference(x_btE, w1, b1, w2, b2, hsize):
    """Pure-JAX reference mirroring the PyTorch loop."""
    B, T, E = x_btE.shape
    h = jnp.zeros((B, hsize), jnp.float32)
    outs = []
    for i in range(T):
        comb = jnp.concatenate([x_btE[:, i, :], h], axis=1)
        h = jnp.tanh(comb @ w1.T + b1)
        outs.append((h @ w2.T + b2)[:, None, :])
    return jnp.concatenate(outs, axis=1), h


if __name__ == "__main__":
    # Small shapes consistent with the module: insize=outsize=hsize=32.
    B, T, E, H, O = 2, 8, 32, 32, 32

    key = jax.random.PRNGKey(0)
    k_x, k_w1, k_b1, k_w2, k_b2 = jax.random.split(key, 5)

    x = jax.random.normal(k_x, (B, T, E), jnp.float32)
    w1 = 0.1 * jax.random.normal(k_w1, (H, E + H), jnp.float32)  # lin1.weight
    b1 = 0.1 * jax.random.normal(k_b1, (H,), jnp.float32)        # lin1.bias
    w2 = 0.1 * jax.random.normal(k_w2, (O, H), jnp.float32)      # lin2.weight
    b2 = 0.1 * jax.random.normal(k_b2, (O,), jnp.float32)        # lin2.bias

    y, h_last = jax.block_until_ready(elman_forward(x, w1, b1, w2, b2, H))
    y_ref, h_ref = elman_reference(x, w1, b1, w2, b2, H)

    assert y.shape == (B, T, O) and h_last.shape == (B, H)
    np.testing.assert_allclose(np.asarray(y), np.asarray(y_ref),
                               rtol=1e-5, atol=1e-5)
    np.testing.assert_allclose(np.asarray(h_last), np.asarray(h_ref),
                               rtol=1e-5, atol=1e-5)
    print("KERNEL_OK")
</pallas_src>

<mosaic_0001>
module attributes {stable_mosaic.version = 11 : i64} {
  func.func @elman_kernel(%arg0: memref<64x32xf32, #tpu.memory_space<vmem>>, %arg1: memref<32x32xf32, #tpu.memory_space<vmem>>, %arg2: memref<32x32xf32, #tpu.memory_space<vmem>>, %arg3: memref<1x32xf32, #tpu.memory_space<vmem>>, %arg4: memref<32x128xf32, #tpu.memory_space<vmem>>, %arg5: memref<1x128xf32, #tpu.memory_space<vmem>>, %arg6: memref<64x128xf32, #tpu.memory_space<vmem>>, %arg7: memref<8x32xf32, #tpu.memory_space<vmem>>, %arg8: memref<64x32xf32, #tpu.memory_space<vmem>>) attributes {dimension_semantics = [], scalar_prefetch = 0 : i64, scratch_operands = 1 : i64, tpu.core_type = #tpu.core_type<tc>} {
    %c0 = arith.constant 0 : index
    %c0_0 = arith.constant 0 : index
    %0 = vector.load %arg0[%c0, %c0_0] : memref<64x32xf32, #tpu.memory_space<vmem>>, vector<64x32xf32>
    %c0_1 = arith.constant 0 : index
    %c0_2 = arith.constant 0 : index
    %1 = vector.load %arg1[%c0_1, %c0_2] : memref<32x32xf32, #tpu.memory_space<vmem>>, vector<32x32xf32>
    %cst = arith.constant dense<0.000000e+00> : vector<64x32xf32>
    %2 = tpu.matmul %0, %1, %cst {dimension_numbers = #tpu.dot_dimension_numbers<[1], [0], [0], [1], [0, 0, 1, 1], [], []>} : vector<64x32xf32>, vector<32x32xf32>, vector<64x32xf32> -> vector<64x32xf32>
    %c0_3 = arith.constant 0 : index
    %c0_4 = arith.constant 0 : index
    %3 = vector.load %arg3[%c0_3, %c0_4] : memref<1x32xf32, #tpu.memory_space<vmem>>, vector<1x32xf32>
    %4 = vector.broadcast %3 : vector<1x32xf32> to vector<64x32xf32>
    %5 = arith.addf %2, %4 : vector<64x32xf32>
    %c0_5 = arith.constant 0 : index
    %c0_6 = arith.constant 0 : index
    %6 = vector.load %arg2[%c0_5, %c0_6] : memref<32x32xf32, #tpu.memory_space<vmem>>, vector<32x32xf32>
    %cst_7 = arith.constant 0.000000e+00 : f32
    %7 = vector.broadcast %cst_7 : f32 to vector<8x32xf32>
    %8 = vector.extract_strided_slice %5 {offsets = [0, 0], sizes = [8, 32], strides = [1, 1]} : vector<64x32xf32> to vector<8x32xf32>
    %cst_8 = arith.constant dense<0.000000e+00> : vector<8x32xf32>
    %9 = tpu.matmul %7, %6, %cst_8 {dimension_numbers = #tpu.dot_dimension_numbers<[1], [0], [0], [1], [0, 0, 1, 1], [], []>} : vector<8x32xf32>, vector<32x32xf32>, vector<8x32xf32> -> vector<8x32xf32>
    %10 = arith.addf %8, %9 : vector<8x32xf32>
    %11 = math.tanh %10 : vector<8x32xf32>
    %c0_9 = arith.constant 0 : index
    %c0_10 = arith.constant 0 : index
    %12 = vector.load %arg8[%c0_9, %c0_10] : memref<64x32xf32, #tpu.memory_space<vmem>>, vector<8x32xf32>
    tpu.vector_store %arg8[%c0_9, %c0_10], %11 {strides = array<i32>} : memref<64x32xf32, #tpu.memory_space<vmem>>, vector<8x32xf32>,
    %13 = vector.extract_strided_slice %5 {offsets = [8, 0], sizes = [8, 32], strides = [1, 1]} : vector<64x32xf32> to vector<8x32xf32>
    %cst_11 = arith.constant dense<0.000000e+00> : vector<8x32xf32>
    %14 = tpu.matmul %11, %6, %cst_11 {dimension_numbers = #tpu.dot_dimension_numbers<[1], [0], [0], [1], [0, 0, 1, 1], [], []>} : vector<8x32xf32>, vector<32x32xf32>, vector<8x32xf32> -> vector<8x32xf32>
    %15 = arith.addf %13, %14 : vector<8x32xf32>
    %16 = math.tanh %15 : vector<8x32xf32>
    %c8 = arith.constant 8 : index
    %c0_12 = arith.constant 0 : index
    %17 = vector.load %arg8[%c8, %c0_12] : memref<64x32xf32, #tpu.memory_space<vmem>>, vector<8x32xf32>
    tpu.vector_store %arg8[%c8, %c0_12], %16 {strides = array<i32>} : memref<64x32xf32, #tpu.memory_space<vmem>>, vector<8x32xf32>,
    %18 = vector.extract_strided_slice %5 {offsets = [16, 0], sizes = [8, 32], strides = [1, 1]} : vector<64x32xf32> to vector<8x32xf32>
    %cst_13 = arith.constant dense<0.000000e+00> : vector<8x32xf32>
    %19 = tpu.matmul %16, %6, %cst_13 {dimension_numbers = #tpu.dot_dimension_numbers<[1], [0], [0], [1], [0, 0, 1, 1], [], []>} : vector<8x32xf32>, vector<32x32xf32>, vector<8x32xf32> -> vector<8x32xf32>
    %20 = arith.addf %18, %19 : vector<8x32xf32>
    %21 = math.tanh %20 : vector<8x32xf32>
    %c16 = arith.constant 16 : index
    %c0_14 = arith.constant 0 : index
    %22 = vector.load %arg8[%c16, %c0_14] : memref<64x32xf32, #tpu.memory_space<vmem>>, vector<8x32xf32>
    tpu.vector_store %arg8[%c16, %c0_14], %21 {strides = array<i32>} : memref<64x32xf32, #tpu.memory_space<vmem>>, vector<8x32xf32>,
    %23 = vector.extract_strided_slice %5 {offsets = [24, 0], sizes = [8, 32], strides = [1, 1]} : vector<64x32xf32> to vector<8x32xf32>
    %cst_15 = arith.constant dense<0.000000e+00> : vector<8x32xf32>
    %24 = tpu.matmul %21, %6, %cst_15 {dimension_numbers = #tpu.dot_dimension_numbers<[1], [0], [0], [1], [0, 0, 1, 1], [], []>} : vector<8x32xf32>, vector<32x32xf32>, vector<8x32xf32> -> vector<8x32xf32>
    %25 = arith.addf %23, %24 : vector<8x32xf32>
    %26 = math.tanh %25 : vector<8x32xf32>
    %c24 = arith.constant 24 : index
    %c0_16 = arith.constant 0 : index
    %27 = vector.load %arg8[%c24, %c0_16] : memref<64x32xf32, #tpu.memory_space<vmem>>, vector<8x32xf32>
    tpu.vector_store %arg8[%c24, %c0_16], %26 {strides = array<i32>} : memref<64x32xf32, #tpu.memory_space<vmem>>, vector<8x32xf32>,
    %28 = vector.extract_strided_slice %5 {offsets = [32, 0], sizes = [8, 32], strides = [1, 1]} : vector<64x32xf32> to vector<8x32xf32>
    %cst_17 = arith.constant dense<0.000000e+00> : vector<8x32xf32>
    %29 = tpu.matmul %26, %6, %cst_17 {dimension_numbers = #tpu.dot_dimension_numbers<[1], [0], [0], [1], [0, 0, 1, 1], [], []>} : vector<8x32xf32>, vector<32x32xf32>, vector<8x32xf32> -> vector<8x32xf32>
    %30 = arith.addf %28, %29 : vector<8x32xf32>
    %31 = math.tanh %30 : vector<8x32xf32>
    %c32 = arith.constant 32 : index
    %c0_18 = arith.constant 0 : index
    %32 = vector.load %arg8[%c32, %c0_18] : memref<64x32xf32, #tpu.memory_space<vmem>>, vector<8x32xf32>
    tpu.vector_store %arg8[%c32, %c0_18], %31 {strides = array<i32>} : memref<64x32xf32, #tpu.memory_space<vmem>>, vector<8x32xf32>,
    %33 = vector.extract_strided_slice %5 {offsets = [40, 0], sizes = [8, 32], strides = [1, 1]} : vector<64x32xf32> to vector<8x32xf32>
    %cst_19 = arith.constant dense<0.000000e+00> : vector<8x32xf32>
    %34 = tpu.matmul %31, %6, %cst_19 {dimension_numbers = #tpu.dot_dimension_numbers<[1], [0], [0], [1], [0, 0, 1, 1], [], []>} : vector<8x32xf32>, vector<32x32xf32>, vector<8x32xf32> -> vector<8x32xf32>
    %35 = arith.addf %33, %34 : vector<8x32xf32>
    %36 = math.tanh %35 : vector<8x32xf32>
    %c40 = arith.constant 40 : index
    %c0_20 = arith.constant 0 : index
    %37 = vector.load %arg8[%c40, %c0_20] : memref<64x32xf32, #tpu.memory_space<vmem>>, vector<8x32xf32>
    tpu.vector_store %arg8[%c40, %c0_20], %36 {strides = array<i32>} : memref<64x32xf32, #tpu.memory_space<vmem>>, vector<8x32xf32>,
    %38 = vector.extract_strided_slice %5 {offsets = [48, 0], sizes = [8, 32], strides = [1, 1]} : vector<64x32xf32> to vector<8x32xf32>
    %cst_21 = arith.constant dense<0.000000e+00> : vector<8x32xf32>
    %39 = tpu.matmul %36, %6, %cst_21 {dimension_numbers = #tpu.dot_dimension_numbers<[1], [0], [0], [1], [0, 0, 1, 1], [], []>} : vector<8x32xf32>, vector<32x32xf32>, vector<8x32xf32> -> vector<8x32xf32>
    %40 = arith.addf %38, %39 : vector<8x32xf32>
    %41 = math.tanh %40 : vector<8x32xf32>
    %c48 = arith.constant 48 : index
    %c0_22 = arith.constant 0 : index
    %42 = vector.load %arg8[%c48, %c0_22] : memref<64x32xf32, #tpu.memory_space<vmem>>, vector<8x32xf32>
    tpu.vector_store %arg8[%c48, %c0_22], %41 {strides = array<i32>} : memref<64x32xf32, #tpu.memory_space<vmem>>, vector<8x32xf32>,
    %43 = vector.extract_strided_slice %5 {offsets = [56, 0], sizes = [8, 32], strides = [1, 1]} : vector<64x32xf32> to vector<8x32xf32>
    %cst_23 = arith.constant dense<0.000000e+00> : vector<8x32xf32>
    %44 = tpu.matmul %41, %6, %cst_23 {dimension_numbers = #tpu.dot_dimension_numbers<[1], [0], [0], [1], [0, 0, 1, 1], [], []>} : vector<8x32xf32>, vector<32x32xf32>, vector<8x32xf32> -> vector<8x32xf32>
    %45 = arith.addf %43, %44 : vector<8x32xf32>
    %46 = math.tanh %45 : vector<8x32xf32>
    %c56 = arith.constant 56 : index
    %c0_24 = arith.constant 0 : index
    %47 = vector.load %arg8[%c56, %c0_24] : memref<64x32xf32, #tpu.memory_space<vmem>>, vector<8x32xf32>
    tpu.vector_store %arg8[%c56, %c0_24], %46 {strides = array<i32>} : memref<64x32xf32, #tpu.memory_space<vmem>>, vector<8x32xf32>,
    %c0_25 = arith.constant 0 : index
    %c0_26 = arith.constant 0 : index
    %48 = vector.load %arg8[%c0_25, %c0_26] : memref<64x32xf32, #tpu.memory_space<vmem>>, vector<64x32xf32>
    %c0_27 = arith.constant 0 : index
    %c0_28 = arith.constant 0 : index
    %49 = vector.load %arg4[%c0_27, %c0_28] : memref<32x128xf32, #tpu.memory_space<vmem>>, vector<32x128xf32>
    %cst_29 = arith.constant dense<0.000000e+00> : vector<64x128xf32>
    %50 = tpu.matmul %48, %49, %cst_29 {dimension_numbers = #tpu.dot_dimension_numbers<[1], [0], [0], [1], [0, 0, 1, 1], [], []>} : vector<64x32xf32>, vector<32x128xf32>, vector<64x128xf32> -> vector<64x128xf32>
    %c0_30 = arith.constant 0 : index
    %c0_31 = arith.constant 0 : index
    %51 = vector.load %arg5[%c0_30, %c0_31] : memref<1x128xf32, #tpu.memory_space<vmem>>, vector<1x128xf32>
    %52 = vector.broadcast %51 : vector<1x128xf32> to vector<64x128xf32>
    %53 = arith.addf %50, %52 : vector<64x128xf32>
    %c0_32 = arith.constant 0 : index
    %c0_33 = arith.constant 0 : index
    %54 = vector.load %arg6[%c0_32, %c0_33] : memref<64x128xf32, #tpu.memory_space<vmem>>, vector<64x128xf32>
    tpu.vector_store %arg6[%c0_32, %c0_33], %53 {strides = array<i32>} : memref<64x128xf32, #tpu.memory_space<vmem>>, vector<64x128xf32>,
    %c0_34 = arith.constant 0 : index
    %c0_35 = arith.constant 0 : index
    %55 = vector.load %arg7[%c0_34, %c0_35] : memref<8x32xf32, #tpu.memory_space<vmem>>, vector<8x32xf32>
    tpu.vector_store %arg7[%c0_34, %c0_35], %46 {strides = array<i32>} : memref<8x32xf32, #tpu.memory_space<vmem>>, vector<8x32xf32>,
    return
  }
}

</mosaic_0001>

<llo_original>
// kernel: tpu_custom_call.1
$region0: #{tpu_custom_call.1}
  #allocation0 [shape = 'u32[]', space=smem, size = 0x4, offset = 0x4, fixed_abs, tag = 'smem constant byte address 0x4 - core index']
  #allocation1 [shape = 'u32[144,128]{1,0:T(1,128)}', space=vmem, size = 0x12000, scoped, tag = 'internal scratch']
  #allocation2 [shape = 'f32[64,32]{1,0:T(8,128)}', space=vmem, size = 0x8000, scoped, tag = 'scratch operand']
  %s0 = inlined_call_operand.vmem [shape: f32[64,32], index: 0, kind: input, shape index: {}]
  %s1 = inlined_call_operand.vmem [shape: f32[32,32], index: 1, kind: input, shape index: {}]
  %s2 = inlined_call_operand.vmem [shape: f32[32,32], index: 2, kind: input, shape index: {}]
  %s3 = inlined_call_operand.vmem [shape: f32[1,32], index: 3, kind: input, shape index: {}]
  %s4 = inlined_call_operand.vmem [shape: f32[32,128], index: 4, kind: input, shape index: {}]
  %s5 = inlined_call_operand.vmem [shape: f32[1,128], index: 5, kind: input, shape index: {}]
  %s6 = inlined_call_operand.hbm [shape: f32[64,128], index: 6, kind: output, shape index: {0}]
  %s7 = inlined_call_operand.hbm [shape: f32[8,32], index: 7, kind: output, shape index: {1}]
  %8 = xla_tuple %s6, %s7
  %s9 = sld [smem:[#allocation0]]
  $region42: #{tpu_custom_call.1} parent=0
    _
  %s11 = ssub.s32 1, %s9
  %s12 = scalar_select 0, %s11, %s9
  $region1: #{tpu_custom_call.1} parent=0
    #allocation3 [shape = 'u8[32768]{0}', space=vmem, size = 0x8000, scoped, tag = 'output window, operand 0, single buffered']
    #allocation4 [shape = 's32[1]{0}', space=sflag, size = 0x4, scoped, tag = 'scoped memory for tpu_custom_call.1']
    #allocation5 [shape = 'u8[4096]{0}', space=vmem, size = 0x1000, scoped, tag = 'output window, operand 1, single buffered']
    #allocation6 [shape = 's32[1]{0}', space=sflag, size = 0x4, scoped, tag = 'scoped memory for tpu_custom_call.1']
    %13 = vsyncpa [#allocation4], 0
    %14 = vsyncpa [#allocation6], 0
    // Predicated region
    $region2: #{tpu_custom_call.1} parent=1 // pred_check
      _
    $region3: #{tpu_custom_call.1} parent=1 // pred_check_branch
      %16 = sbr.rel (0) target = $region5
    $region4: #{tpu_custom_call.1} parent=1 // pred_region
      _
    $region5: #{tpu_custom_call.1} parent=1 // pred_fallthru
      _
    // Predicated region
    $region6: #{tpu_custom_call.1} parent=1 // pred_check
      _
    $region7: #{tpu_custom_call.1} parent=1 // pred_check_branch
      %18 = sbr.rel (0) target = $region9
    $region8: #{tpu_custom_call.1} parent=1 // pred_region
      _
    $region9: #{tpu_custom_call.1} parent=1 // pred_fallthru
      _
    // Predicated region
    $region10: #{tpu_custom_call.1} parent=1 // pred_check
      _
    $region11: #{tpu_custom_call.1} parent=1 // pred_check_branch
      %20 = sbr.rel (0) target = $region13
    $region12: #{tpu_custom_call.1} parent=1 // pred_region
      _
    $region13: #{tpu_custom_call.1} parent=1 // pred_fallthru
      _
    // Predicated region
    $region14: #{tpu_custom_call.1} parent=1 // pred_check
      _
    $region15: #{tpu_custom_call.1} parent=1 // pred_check_branch
      %22 = sbr.rel (0) target = $region17
    $region16: #{tpu_custom_call.1} parent=1 // pred_region
      _
    $region17: #{tpu_custom_call.1} parent=1 // pred_fallthru
      _
    // Predicated region
    $region18: #{tpu_custom_call.1} parent=1 // pred_check
      _
    $region19: #{tpu_custom_call.1} parent=1 // pred_check_branch
      %24 = sbr.rel (0) target = $region21
    $region20: #{tpu_custom_call.1} parent=1 // pred_region
      _
    $region21: #{tpu_custom_call.1} parent=1 // pred_fallthru
      _
    // Predicated region
    $region22: #{tpu_custom_call.1} parent=1 // pred_check
      _
    $region23: #{tpu_custom_call.1} parent=1 // pred_check_branch
      %26 = sbr.rel (0) target = $region25
    $region24: #{tpu_custom_call.1} parent=1 // pred_region
      _
    $region25: #{tpu_custom_call.1} parent=1 // pred_fallthru
      _
    %v27 = vld [vmem:[%s0] sm:$0xff]
    %v28 = vld [vmem:[%s0 + $0x8] sm:$0xff]
    %v29 = vld [vmem:[%s0 + $0x10] sm:$0xff]
    %v30 = vld [vmem:[%s0 + $0x18] sm:$0xff]
    %v31 = vld [vmem:[%s0 + $0x20] sm:$0xff]
    %v32 = vld [vmem:[%s0 + $0x28] sm:$0xff]
    %v33 = vld [vmem:[%s0 + $0x30] sm:$0xff]
    %v34 = vld [vmem:[%s0 + $0x38] sm:$0xff]
    %v35 = vld [vmem:[%s1] sm:$0xff]
    %v36 = vld [vmem:[%s1 + $0x8] sm:$0xff]
    %v37 = vld [vmem:[%s1 + $0x10] sm:$0xff]
    %v38 = vld [vmem:[%s1 + $0x18] sm:$0xff]
    %v39 = vld [vmem:[%s3] sm:$0x1]
    %v41 = vlaneseq
    %v42 = vshrl.u32 %v41, 7
    %v43 = vsub.s32 0, %v42
    %v44 = vrot.slane %v39, %v43
    %vm46 = vcmask 261120
    %v48 = vsel %vm46, %v27, 0
    %v51 = vsel %vm46, %v28, 0
    %v54 = vsel %vm46, %v29, 0
    %v57 = vsel %vm46, %v30, 0
    %v60 = vsel %vm46, %v31, 0
    %v63 = vsel %vm46, %v32, 0
    %v66 = vsel %vm46, %v33, 0
    %v69 = vsel %vm46, %v34, 0
    %71 = vmatprep.subr.mxu0 0.0
    %72 = vmatpush1.msra.mxu0 0.0
    %73 = vmatprep.subr.mxu0 0.0
    %74 = vmatpush1.msra.mxu0 0.0
    %75 = vmatprep.subr.mxu0 0.0
    %76 = vmatpush1.msra.mxu0 0.0
    %77 = vmatprep.subr.mxu0 0.0
    %78 = vmatpush1.msra.mxu0 0.0
    %79 = vmatprep.subr.mxu0 0.0
    %80 = vmatpush1.msra.mxu0 0.0
    %81 = vmatprep.subr.mxu0 0.0
    %82 = vmatpush1.msra.mxu0 0.0
    %83 = vmatprep.subr.mxu0 0.0
    %84 = vmatpush1.msra.mxu0 0.0
    %85 = vmatprep.subr.mxu0 0.0
    %86 = vmatpush1.msra.mxu0 0.0
    %87 = vmatprep.subr.mxu0 0.0
    %88 = vmatpush1.msra.mxu0 0.0
    %89 = vmatprep.subr.mxu0 0.0
    %90 = vmatpush1.msra.mxu0 0.0
    %91 = vmatprep.subr.mxu0 0.0
    %92 = vmatpush1.msra.mxu0 0.0
    %93 = vmatprep.subr.mxu0 0.0
    %94 = vmatpush1.msra.mxu0 0.0
    %95 = vmatprep.subr.mxu0 0.0
    %96 = vmatpush1.msra.mxu0 %v38
    %97 = vmatprep.subr.mxu0 0.0
    %98 = vmatpush1.msra.mxu0 %v37
    %99 = vmatprep.subr.mxu0 0.0
    %100 = vmatpush1.msra.mxu0 %v36
    %101 = vmatprep.subr.mxu0 0.0
    %102 = vmatpush1.msra.mxu0 %v35
    %103 = vmatprep.subr.mxu0 0.0
    %104 = vmatpush2.msra.mxu0 0.0
    %105 = vmatprep.subr.mxu0 0.0
    %106 = vmatpush2.msra.mxu0 0.0
    %107 = vmatprep.subr.mxu0 0.0
    %108 = vmatpush2.msra.mxu0 0.0
    %109 = vmatprep.subr.mxu0 0.0
    %110 = vmatpush2.msra.mxu0 0.0
    %111 = vmatprep.subr.mxu0 0.0
    %112 = vmatpush2.msra.mxu0 0.0
    %113 = vmatprep.subr.mxu0 0.0
    %114 = vmatpush2.msra.mxu0 0.0
    %115 = vmatprep.subr.mxu0 0.0
    %116 = vmatpush2.msra.mxu0 0.0
    %117 = vmatprep.subr.mxu0 0.0
    %118 = vmatpush2.msra.mxu0 0.0
    %119 = vmatprep.subr.mxu0 0.0
    %120 = vmatpush2.msra.mxu0 0.0
    %121 = vmatprep.subr.mxu0 0.0
    %122 = vmatpush2.msra.mxu0 0.0
    %123 = vmatprep.subr.mxu0 0.0
    %124 = vmatpush2.msra.mxu0 0.0
    %125 = vmatprep.subr.mxu0 0.0
    %126 = vmatpush2.msra.mxu0 0.0
    %127 = vmatprep.subr.mxu0 0.0
    %128 = vmatpush2.msra.mxu0 0.0
    %129 = vmatprep.subr.mxu0 0.0
    %130 = vmatpush2.msra.mxu0 0.0
    %131 = vmatprep.subr.mxu0 0.0
    %132 = vmatpush2.msra.mxu0 0.0
    %133 = vmatprep.subr.mxu0 0.0
    %134 = vmatpush2.msra.mxu0 0.0
    %135 = vmatprep.mubr.f32.mxu0 0.0
    %136 = vmatmul.mubr.f32.gmra.mxu0 %v48
    %v137 = vpop.f32.mrf.mxu0
    %v138 = vadd.f32 %v44, %v137
    %v139 = vpop.f32.mrf.mxu0
    %140 = vmatprep.mubr.f32.mxu0 0.0
    %141 = vmatmul.mubr.f32.gmra.mxu0 %v51
    %v142 = vpop.f32.mrf.mxu0
    %v143 = vadd.f32 %v44, %v142
    %v144 = vpop.f32.mrf.mxu0
    %145 = vmatprep.mubr.f32.mxu0 0.0
    %146 = vmatmul.mubr.f32.gmra.mxu0 %v54
    %v147 = vpop.f32.mrf.mxu0
    %v148 = vadd.f32 %v44, %v147
    %v149 = vpop.f32.mrf.mxu0
    %150 = vmatprep.mubr.f32.mxu0 0.0
    %151 = vmatmul.mubr.f32.gmra.mxu0 %v57
    %v152 = vpop.f32.mrf.mxu0
    %v153 = vadd.f32 %v44, %v152
    %v154 = vpop.f32.mrf.mxu0
    %155 = vmatprep.mubr.f32.mxu0 0.0
    %156 = vmatmul.mubr.f32.gmra.mxu0 %v60
    %v157 = vpop.f32.mrf.mxu0
    %v158 = vadd.f32 %v44, %v157
    %v159 = vpop.f32.mrf.mxu0
    %160 = vmatprep.mubr.f32.mxu0 0.0
    %161 = vmatmul.mubr.f32.gmra.mxu0 %v63
    %v162 = vpop.f32.mrf.mxu0
    %v163 = vadd.f32 %v44, %v162
    %v164 = vpop.f32.mrf.mxu0
    %165 = vmatprep.mubr.f32.mxu0 0.0
    %166 = vmatmul.mubr.f32.gmra.mxu0 %v66
    %v167 = vpop.f32.mrf.mxu0
    %v168 = vadd.f32 %v44, %v167
    %v169 = vpop.f32.mrf.mxu0
    %170 = vmatprep.mubr.f32.mxu0 0.0
    %171 = vmatmul.mubr.f32.gmra.mxu0 %v69
    %v172 = vpop.f32.mrf.mxu0
    %v173 = vadd.f32 %v44, %v172
    %v174 = vpop.f32.mrf.mxu0
    %175 = vdwg.mxu0
    %v176 = vld [vmem:[%s2] sm:$0xff]
    %v177 = vld [vmem:[%s2 + $0x8] sm:$0xff]
    %v178 = vld [vmem:[%s2 + $0x10] sm:$0xff]
    %v179 = vld [vmem:[%s2 + $0x18] sm:$0xff]
    %v181 = vsel %vm46, 0.0, 0
    %183 = vmatprep.subr.mxu0 0.0
    %184 = vmatpush1.msra.mxu0 0.0
    %185 = vmatprep.subr.mxu0 0.0
    %186 = vmatpush1.msra.mxu0 0.0
    %187 = vmatprep.subr.mxu0 0.0
    %188 = vmatpush1.msra.mxu0 0.0
    %189 = vmatprep.subr.mxu0 0.0
    %190 = vmatpush1.msra.mxu0 0.0
    %191 = vmatprep.subr.mxu0 0.0
    %192 = vmatpush1.msra.mxu0 0.0
    %193 = vmatprep.subr.mxu0 0.0
    %194 = vmatpush1.msra.mxu0 0.0
    %195 = vmatprep.subr.mxu0 0.0
    %196 = vmatpush1.msra.mxu0 0.0
    %197 = vmatprep.subr.mxu0 0.0
    %198 = vmatpush1.msra.mxu0 0.0
    %199 = vmatprep.subr.mxu0 0.0
    %200 = vmatpush1.msra.mxu0 0.0
    %201 = vmatprep.subr.mxu0 0.0
    %202 = vmatpush1.msra.mxu0 0.0
    %203 = vmatprep.subr.mxu0 0.0
    %204 = vmatpush1.msra.mxu0 0.0
    %205 = vmatprep.subr.mxu0 0.0
    %206 = vmatpush1.msra.mxu0 0.0
    %207 = vmatprep.subr.mxu0 0.0
    %208 = vmatpush1.msra.mxu0 %v179
    %209 = vmatprep.subr.mxu0 0.0
    %210 = vmatpush1.msra.mxu0 %v178
    %211 = vmatprep.subr.mxu0 0.0
    %212 = vmatpush1.msra.mxu0 %v177
    %213 = vmatprep.subr.mxu0 0.0
    %214 = vmatpush1.msra.mxu0 %v176
    %215 = vmatprep.subr.mxu0 0.0
    %216 = vmatpush2.msra.mxu0 0.0
    %217 = vmatprep.subr.mxu0 0.0
    %218 = vmatpush2.msra.mxu0 0.0
    %219 = vmatprep.subr.mxu0 0.0
    %220 = vmatpush2.msra.mxu0 0.0
    %221 = vmatprep.subr.mxu0 0.0
    %222 = vmatpush2.msra.mxu0 0.0
    %223 = vmatprep.subr.mxu0 0.0
    %224 = vmatpush2.msra.mxu0 0.0
    %225 = vmatprep.subr.mxu0 0.0
    %226 = vmatpush2.msra.mxu0 0.0
    %227 = vmatprep.subr.mxu0 0.0
    %228 = vmatpush2.msra.mxu0 0.0
    %229 = vmatprep.subr.mxu0 0.0
    %230 = vmatpush2.msra.mxu0 0.0
    %231 = vmatprep.subr.mxu0 0.0
    %232 = vmatpush2.msra.mxu0 0.0
    %233 = vmatprep.subr.mxu0 0.0
    %234 = vmatpush2.msra.mxu0 0.0
    %235 = vmatprep.subr.mxu0 0.0
    %236 = vmatpush2.msra.mxu0 0.0
    %237 = vmatprep.subr.mxu0 0.0
    %238 = vmatpush2.msra.mxu0 0.0
    %239 = vmatprep.subr.mxu0 0.0
    %240 = vmatpush2.msra.mxu0 0.0
    %241 = vmatprep.subr.mxu0 0.0
    %242 = vmatpush2.msra.mxu0 0.0
    %243 = vmatprep.subr.mxu0 0.0
    %244 = vmatpush2.msra.mxu0 0.0
    %245 = vmatprep.subr.mxu0 0.0
    %246 = vmatpush2.msra.mxu0 0.0
    %247 = vmatprep.mubr.f32.mxu0 0.0
    %248 = vmatmul.mubr.f32.gmra.mxu0 %v181
    %v249 = vpop.f32.mrf.mxu0
    %v250 = vadd.f32 0.0, %v249
    %v251 = vpop.f32.mrf.mxu0
    %252 = vdwg.mxu0
    %v253 = vadd.f32 %v138, %v250
    %v254 = vtanh.pop %v253
    %255 = vst.msk [vmem:[#allocation2] sm:$0xff] %vm46, %v254
    %v257 = vsel %vm46, %v254, 0
    %259 = vmatprep.subr.mxu0 0.0
    %260 = vmatpush1.msra.mxu0 0.0
    %261 = vmatprep.subr.mxu0 0.0
    %262 = vmatpush1.msra.mxu0 0.0
    %263 = vmatprep.subr.mxu0 0.0
    %264 = vmatpush1.msra.mxu0 0.0
    %265 = vmatprep.subr.mxu0 0.0
    %266 = vmatpush1.msra.mxu0 0.0
    %267 = vmatprep.subr.mxu0 0.0
    %268 = vmatpush1.msra.mxu0 0.0
    %269 = vmatprep.subr.mxu0 0.0
    %270 = vmatpush1.msra.mxu0 0.0
    %271 = vmatprep.subr.mxu0 0.0
    %272 = vmatpush1.msra.mxu0 0.0
    %273 = vmatprep.subr.mxu0 0.0
    %274 = vmatpush1.msra.mxu0 0.0
    %275 = vmatprep.subr.mxu0 0.0
    %276 = vmatpush1.msra.mxu0 0.0
    %277 = vmatprep.subr.mxu0 0.0
    %278 = vmatpush1.msra.mxu0 0.0
    %279 = vmatprep.subr.mxu0 0.0
    %280 = vmatpush1.msra.mxu0 0.0
    %281 = vmatprep.subr.mxu0 0.0
    %282 = vmatpush1.msra.mxu0 0.0
    %283 = vmatprep.subr.mxu0 0.0
    %284 = vmatpush1.msra.mxu0 %v179
    %285 = vmatprep.subr.mxu0 0.0
    %286 = vmatpush1.msra.mxu0 %v178
    %287 = vmatprep.subr.mxu0 0.0
    %288 = vmatpush1.msra.mxu0 %v177
    %289 = vmatprep.subr.mxu0 0.0
    %290 = vmatpush1.msra.mxu0 %v176
    %291 = vmatprep.subr.mxu0 0.0
    %292 = vmatpush2.msra.mxu0 0.0
    %293 = vmatprep.subr.mxu0 0.0
    %294 = vmatpush2.msra.mxu0 0.0
    %295 = vmatprep.subr.mxu0 0.0
    %296 = vmatpush2.msra.mxu0 0.0
    %297 = vmatprep.subr.mxu0 0.0
    %298 = vmatpush2.msra.mxu0 0.0
    %299 = vmatprep.subr.mxu0 0.0
    %300 = vmatpush2.msra.mxu0 0.0
    %301 = vmatprep.subr.mxu0 0.0
    %302 = vmatpush2.msra.mxu0 0.0
    %303 = vmatprep.subr.mxu0 0.0
    %304 = vmatpush2.msra.mxu0 0.0
    %305 = vmatprep.subr.mxu0 0.0
    %306 = vmatpush2.msra.mxu0 0.0
    %307 = vmatprep.subr.mxu0 0.0
    %308 = vmatpush2.msra.mxu0 0.0
    %309 = vmatprep.subr.mxu0 0.0
    %310 = vmatpush2.msra.mxu0 0.0
    %311 = vmatprep.subr.mxu0 0.0
    %312 = vmatpush2.msra.mxu0 0.0
    %313 = vmatprep.subr.mxu0 0.0
    %314 = vmatpush2.msra.mxu0 0.0
    %315 = vmatprep.subr.mxu0 0.0
    %316 = vmatpush2.msra.mxu0 0.0
    %317 = vmatprep.subr.mxu0 0.0
    %318 = vmatpush2.msra.mxu0 0.0
    %319 = vmatprep.subr.mxu0 0.0
    %320 = vmatpush2.msra.mxu0 0.0
    %321 = vmatprep.subr.mxu0 0.0
    %322 = vmatpush2.msra.mxu0 0.0
    %323 = vmatprep.mubr.f32.mxu0 0.0
    %324 = vmatmul.mubr.f32.gmra.mxu0 %v257
    %v325 = vpop.f32.mrf.mxu0
    %v326 = vadd.f32 0.0, %v325
    %v327 = vpop.f32.mrf.mxu0
    %328 = vdwg.mxu0
    %v329 = vadd.f32 %v143, %v326
    %v330 = vtanh.pop %v329
    %331 = vst.msk [vmem:[#allocation2 + $0x8] sm:$0xff] %vm46, %v330
    %v333 = vsel %vm46, %v330, 0
    %335 = vmatprep.subr.mxu0 0.0
    %336 = vmatpush1.msra.mxu0 0.0
    %337 = vmatprep.subr.mxu0 0.0
    %338 = vmatpush1.msra.mxu0 0.0
    %339 = vmatprep.subr.mxu0 0.0
    %340 = vmatpush1.msra.mxu0 0.0
    %341 = vmatprep.subr.mxu0 0.0
    %342 = vmatpush1.msra.mxu0 0.0
    %343 = vmatprep.subr.mxu0 0.0
    %344 = vmatpush1.msra.mxu0 0.0
    %345 = vmatprep.subr.mxu0 0.0
    %346 = vmatpush1.msra.mxu0 0.0
    %347 = vmatprep.subr.mxu0 0.0
    %348 = vmatpush1.msra.mxu0 0.0
    %349 = vmatprep.subr.mxu0 0.0
    %350 = vmatpush1.msra.mxu0 0.0
    %351 = vmatprep.subr.mxu0 0.0
    %352 = vmatpush1.msra.mxu0 0.0
    %353 = vmatprep.subr.mxu0 0.0
    %354 = vmatpush1.msra.mxu0 0.0
    %355 = vmatprep.subr.mxu0 0.0
    %356 = vmatpush1.msra.mxu0 0.0
    %357 = vmatprep.subr.mxu0 0.0
    %358 = vmatpush1.msra.mxu0 0.0
    %359 = vmatprep.subr.mxu0 0.0
    %360 = vmatpush1.msra.mxu0 %v179
    %361 = vmatprep.subr.mxu0 0.0
    %362 = vmatpush1.msra.mxu0 %v178
    %363 = vmatprep.subr.mxu0 0.0
    %364 = vmatpush1.msra.mxu0 %v177
    %365 = vmatprep.subr.mxu0 0.0
    %366 = vmatpush1.msra.mxu0 %v176
    %367 = vmatprep.subr.mxu0 0.0
    %368 = vmatpush2.msra.mxu0 0.0
    %369 = vmatprep.subr.mxu0 0.0
    %370 = vmatpush2.msra.mxu0 0.0
    %371 = vmatprep.subr.mxu0 0.0
    %372 = vmatpush2.msra.mxu0 0.0
    %373 = vmatprep.subr.mxu0 0.0
    %374 = vmatpush2.msra.mxu0 0.0
    %375 = vmatprep.subr.mxu0 0.0
    %376 = vmatpush2.msra.mxu0 0.0
    %377 = vmatprep.subr.mxu0 0.0
    %378 = vmatpush2.msra.mxu0 0.0
    %379 = vmatprep.subr.mxu0 0.0
    %380 = vmatpush2.msra.mxu0 0.0
    %381 = vmatprep.subr.mxu0 0.0
    %382 = vmatpush2.msra.mxu0 0.0
    %383 = vmatprep.subr.mxu0 0.0
    %384 = vmatpush2.msra.mxu0 0.0
    %385 = vmatprep.subr.mxu0 0.0
    %386 = vmatpush2.msra.mxu0 0.0
    %387 = vmatprep.subr.mxu0 0.0
    %388 = vmatpush2.msra.mxu0 0.0
    %389 = vmatprep.subr.mxu0 0.0
    %390 = vmatpush2.msra.mxu0 0.0
    %391 = vmatprep.subr.mxu0 0.0
    %392 = vmatpush2.msra.mxu0 0.0
    %393 = vmatprep.subr.mxu0 0.0
    %394 = vmatpush2.msra.mxu0 0.0
    %395 = vmatprep.subr.mxu0 0.0
    %396 = vmatpush2.msra.mxu0 0.0
    %397 = vmatprep.subr.mxu0 0.0
    %398 = vmatpush2.msra.mxu0 0.0
    %399 = vmatprep.mubr.f32.mxu0 0.0
    %400 = vmatmul.mubr.f32.gmra.mxu0 %v333
    %v401 = vpop.f32.mrf.mxu0
    %v402 = vadd.f32 0.0, %v401
    %v403 = vpop.f32.mrf.mxu0
    %404 = vdwg.mxu0
    %v405 = vadd.f32 %v148, %v402
    %v406 = vtanh.pop %v405
    %407 = vst.msk [vmem:[#allocation2 + $0x10] sm:$0xff] %vm46, %v406
    %v409 = vsel %vm46, %v406, 0
    %411 = vmatprep.subr.mxu0 0.0
    %412 = vmatpush1.msra.mxu0 0.0
    %413 = vmatprep.subr.mxu0 0.0
    %414 = vmatpush1.msra.mxu0 0.0
    %415 = vmatprep.subr.mxu0 0.0
    %416 = vmatpush1.msra.mxu0 0.0
    %417 = vmatprep.subr.mxu0 0.0
    %418 = vmatpush1.msra.mxu0 0.0
    %419 = vmatprep.subr.mxu0 0.0
    %420 = vmatpush1.msra.mxu0 0.0
    %421 = vmatprep.subr.mxu0 0.0
    %422 = vmatpush1.msra.mxu0 0.0
    %423 = vmatprep.subr.mxu0 0.0
    %424 = vmatpush1.msra.mxu0 0.0
    %425 = vmatprep.subr.mxu0 0.0
    %426 = vmatpush1.msra.mxu0 0.0
    %427 = vmatprep.subr.mxu0 0.0
    %428 = vmatpush1.msra.mxu0 0.0
    %429 = vmatprep.subr.mxu0 0.0
    %430 = vmatpush1.msra.mxu0 0.0
    %431 = vmatprep.subr.mxu0 0.0
    %432 = vmatpush1.msra.mxu0 0.0
    %433 = vmatprep.subr.mxu0 0.0
    %434 = vmatpush1.msra.mxu0 0.0
    %435 = vmatprep.subr.mxu0 0.0
    %436 = vmatpush1.msra.mxu0 %v179
    %437 = vmatprep.subr.mxu0 0.0
    %438 = vmatpush1.msra.mxu0 %v178
    %439 = vmatprep.subr.mxu0 0.0
    %440 = vmatpush1.msra.mxu0 %v177
    %441 = vmatprep.subr.mxu0 0.0
    %442 = vmatpush1.msra.mxu0 %v176
    %443 = vmatprep.subr.mxu0 0.0
    %444 = vmatpush2.msra.mxu0 0.0
    %445 = vmatprep.subr.mxu0 0.0
    %446 = vmatpush2.msra.mxu0 0.0
    %447 = vmatprep.subr.mxu0 0.0
    %448 = vmatpush2.msra.mxu0 0.0
    %449 = vmatprep.subr.mxu0 0.0
    %450 = vmatpush2.msra.mxu0 0.0
    %451 = vmatprep.subr.mxu0 0.0
    %452 = vmatpush2.msra.mxu0 0.0
    %453 = vmatprep.subr.mxu0 0.0
    %454 = vmatpush2.msra.mxu0 0.0
    %455 = vmatprep.subr.mxu0 0.0
    %456 = vmatpush2.msra.mxu0 0.0
    %457 = vmatprep.subr.mxu0 0.0
    %458 = vmatpush2.msra.mxu0 0.0
    %459 = vmatprep.subr.mxu0 0.0
    %460 = vmatpush2.msra.mxu0 0.0
    %461 = vmatprep.subr.mxu0 0.0
    %462 = vmatpush2.msra.mxu0 0.0
    %463 = vmatprep.subr.mxu0 0.0
    %464 = vmatpush2.msra.mxu0 0.0
    %465 = vmatprep.subr.mxu0 0.0
    %466 = vmatpush2.msra.mxu0 0.0
    %467 = vmatprep.subr.mxu0 0.0
    %468 = vmatpush2.msra.mxu0 0.0
    %469 = vmatprep.subr.mxu0 0.0
    %470 = vmatpush2.msra.mxu0 0.0
    %471 = vmatprep.subr.mxu0 0.0
    %472 = vmatpush2.msra.mxu0 0.0
    %473 = vmatprep.subr.mxu0 0.0
    %474 = vmatpush2.msra.mxu0 0.0
    %475 = vmatprep.mubr.f32.mxu0 0.0
    %476 = vmatmul.mubr.f32.gmra.mxu0 %v409
    %v477 = vpop.f32.mrf.mxu0
    %v478 = vadd.f32 0.0, %v477
    %v479 = vpop.f32.mrf.mxu0
    %480 = vdwg.mxu0
    %v481 = vadd.f32 %v153, %v478
    %v482 = vtanh.pop %v481
    %483 = vst.msk [vmem:[#allocation2 + $0x18] sm:$0xff] %vm46, %v482
    %v485 = vsel %vm46, %v482, 0
    %487 = vmatprep.subr.mxu0 0.0
    %488 = vmatpush1.msra.mxu0 0.0
    %489 = vmatprep.subr.mxu0 0.0
    %490 = vmatpush1.msra.mxu0 0.0
    %491 = vmatprep.subr.mxu0 0.0
    %492 = vmatpush1.msra.mxu0 0.0
    %493 = vmatprep.subr.mxu0 0.0
    %494 = vmatpush1.msra.mxu0 0.0
    %495 = vmatprep.subr.mxu0 0.0
    %496 = vmatpush1.msra.mxu0 0.0
    %497 = vmatprep.subr.mxu0 0.0
    %498 = vmatpush1.msra.mxu0 0.0
    %499 = vmatprep.subr.mxu0 0.0
    %500 = vmatpush1.msra.mxu0 0.0
    %501 = vmatprep.subr.mxu0 0.0
    %502 = vmatpush1.msra.mxu0 0.0
    %503 = vmatprep.subr.mxu0 0.0
    %504 = vmatpush1.msra.mxu0 0.0
    %505 = vmatprep.subr.mxu0 0.0
    %506 = vmatpush1.msra.mxu0 0.0
    %507 = vmatprep.subr.mxu0 0.0
    %508 = vmatpush1.msra.mxu0 0.0
    %509 = vmatprep.subr.mxu0 0.0
    %510 = vmatpush1.msra.mxu0 0.0
    %511 = vmatprep.subr.mxu0 0.0
    %512 = vmatpush1.msra.mxu0 %v179
    %513 = vmatprep.subr.mxu0 0.0
    %514 = vmatpush1.msra.mxu0 %v178
    %515 = vmatprep.subr.mxu0 0.0
    %516 = vmatpush1.msra.mxu0 %v177
    %517 = vmatprep.subr.mxu0 0.0
    %518 = vmatpush1.msra.mxu0 %v176
    %519 = vmatprep.subr.mxu0 0.0
    %520 = vmatpush2.msra.mxu0 0.0
    %521 = vmatprep.subr.mxu0 0.0
    %522 = vmatpush2.msra.mxu0 0.0
    %523 = vmatprep.subr.mxu0 0.0
    %524 = vmatpush2.msra.mxu0 0.0
    %525 = vmatprep.subr.mxu0 0.0
    %526 = vmatpush2.msra.mxu0 0.0
    %527 = vmatprep.subr.mxu0 0.0
    %528 = vmatpush2.msra.mxu0 0.0
    %529 = vmatprep.subr.mxu0 0.0
    %530 = vmatpush2.msra.mxu0 0.0
    %531 = vmatprep.subr.mxu0 0.0
    %532 = vmatpush2.msra.mxu0 0.0
    %533 = vmatprep.subr.mxu0 0.0
    %534 = vmatpush2.msra.mxu0 0.0
    %535 = vmatprep.subr.mxu0 0.0
    %536 = vmatpush2.msra.mxu0 0.0
    %537 = vmatprep.subr.mxu0 0.0
    %538 = vmatpush2.msra.mxu0 0.0
    %539 = vmatprep.subr.mxu0 0.0
    %540 = vmatpush2.msra.mxu0 0.0
    %541 = vmatprep.subr.mxu0 0.0
    %542 = vmatpush2.msra.mxu0 0.0
    %543 = vmatprep.subr.mxu0 0.0
    %544 = vmatpush2.msra.mxu0 0.0
    %545 = vmatprep.subr.mxu0 0.0
    %546 = vmatpush2.msra.mxu0 0.0
    %547 = vmatprep.subr.mxu0 0.0
    %548 = vmatpush2.msra.mxu0 0.0
    %549 = vmatprep.subr.mxu0 0.0
    %550 = vmatpush2.msra.mxu0 0.0
    %551 = vmatprep.mubr.f32.mxu0 0.0
    %552 = vmatmul.mubr.f32.gmra.mxu0 %v485
    %v553 = vpop.f32.mrf.mxu0
    %v554 = vadd.f32 0.0, %v553
    %v555 = vpop.f32.mrf.mxu0
    %556 = vdwg.mxu0
    %v557 = vadd.f32 %v158, %v554
    %v558 = vtanh.pop %v557
    %559 = vst.msk [vmem:[#allocation2 + $0x20] sm:$0xff] %vm46, %v558
    %v561 = vsel %vm46, %v558, 0
    %563 = vmatprep.subr.mxu0 0.0
    %564 = vmatpush1.msra.mxu0 0.0
    %565 = vmatprep.subr.mxu0 0.0
    %566 = vmatpush1.msra.mxu0 0.0
    %567 = vmatprep.subr.mxu0 0.0
    %568 = vmatpush1.msra.mxu0 0.0
    %569 = vmatprep.subr.mxu0 0.0
    %570 = vmatpush1.msra.mxu0 0.0
    %571 = vmatprep.subr.mxu0 0.0
    %572 = vmatpush1.msra.mxu0 0.0
    %573 = vmatprep.subr.mxu0 0.0
    %574 = vmatpush1.msra.mxu0 0.0
    %575 = vmatprep.subr.mxu0 0.0
    %576 = vmatpush1.msra.mxu0 0.0
    %577 = vmatprep.subr.mxu0 0.0
    %578 = vmatpush1.msra.mxu0 0.0
    %579 = vmatprep.subr.mxu0 0.0
    %580 = vmatpush1.msra.mxu0 0.0
    %581 = vmatprep.subr.mxu0 0.0
    %582 = vmatpush1.msra.mxu0 0.0
    %583 = vmatprep.subr.mxu0 0.0
    %584 = vmatpush1.msra.mxu0 0.0
    %585 = vmatprep.subr.mxu0 0.0
    %586 = vmatpush1.msra.mxu0 0.0
    %587 = vmatprep.subr.mxu0 0.0
    %588 = vmatpush1.msra.mxu0 %v179
    %589 = vmatprep.subr.mxu0 0.0
    %590 = vmatpush1.msra.mxu0 %v178
    %591 = vmatprep.subr.mxu0 0.0
    %592 = vmatpush1.msra.mxu0 %v177
    %593 = vmatprep.subr.mxu0 0.0
    %594 = vmatpush1.msra.mxu0 %v176
    %595 = vmatprep.subr.mxu0 0.0
    %596 = vmatpush2.msra.mxu0 0.0
    %597 = vmatprep.subr.mxu0 0.0
    %598 = vmatpush2.msra.mxu0 0.0
    %599 = vmatprep.subr.mxu0 0.0
    %600 = vmatpush2.msra.mxu0 0.0
    %601 = vmatprep.subr.mxu0 0.0
    %602 = vmatpush2.msra.mxu0 0.0
    %603 = vmatprep.subr.mxu0 0.0
    %604 = vmatpush2.msra.mxu0 0.0
    %605 = vmatprep.subr.mxu0 0.0
    %606 = vmatpush2.msra.mxu0 0.0
    %607 = vmatprep.subr.mxu0 0.0
    %608 = vmatpush2.msra.mxu0 0.0
    %609 = vmatprep.subr.mxu0 0.0
    %610 = vmatpush2.msra.mxu0 0.0
    %611 = vmatprep.subr.mxu0 0.0
    %612 = vmatpush2.msra.mxu0 0.0
    %613 = vmatprep.subr.mxu0 0.0
    %614 = vmatpush2.msra.mxu0 0.0
    %615 = vmatprep.subr.mxu0 0.0
    %616 = vmatpush2.msra.mxu0 0.0
    %617 = vmatprep.subr.mxu0 0.0
    %618 = vmatpush2.msra.mxu0 0.0
    %619 = vmatprep.subr.mxu0 0.0
    %620 = vmatpush2.msra.mxu0 0.0
    %621 = vmatprep.subr.mxu0 0.0
    %622 = vmatpush2.msra.mxu0 0.0
    %623 = vmatprep.subr.mxu0 0.0
    %624 = vmatpush2.msra.mxu0 0.0
    %625 = vmatprep.subr.mxu0 0.0
    %626 = vmatpush2.msra.mxu0 0.0
    %627 = vmatprep.mubr.f32.mxu0 0.0
    %628 = vmatmul.mubr.f32.gmra.mxu0 %v561
    %v629 = vpop.f32.mrf.mxu0
    %v630 = vadd.f32 0.0, %v629
    %v631 = vpop.f32.mrf.mxu0
    %632 = vdwg.mxu0
    %v633 = vadd.f32 %v163, %v630
    %v634 = vtanh.pop %v633
    %635 = vst.msk [vmem:[#allocation2 + $0x28] sm:$0xff] %vm46, %v634
    %v637 = vsel %vm46, %v634, 0
    %639 = vmatprep.subr.mxu0 0.0
    %640 = vmatpush1.msra.mxu0 0.0
    %641 = vmatprep.subr.mxu0 0.0
    %642 = vmatpush1.msra.mxu0 0.0
    %643 = vmatprep.subr.mxu0 0.0
    %644 = vmatpush1.msra.mxu0 0.0
    %645 = vmatprep.subr.mxu0 0.0
    %646 = vmatpush1.msra.mxu0 0.0
    %647 = vmatprep.subr.mxu0 0.0
    %648 = vmatpush1.msra.mxu0 0.0
    %649 = vmatprep.subr.mxu0 0.0
    %650 = vmatpush1.msra.mxu0 0.0
    %651 = vmatprep.subr.mxu0 0.0
    %652 = vmatpush1.msra.mxu0 0.0
    %653 = vmatprep.subr.mxu0 0.0
    %654 = vmatpush1.msra.mxu0 0.0
    %655 = vmatprep.subr.mxu0 0.0
    %656 = vmatpush1.msra.mxu0 0.0
    %657 = vmatprep.subr.mxu0 0.0
    %658 = vmatpush1.msra.mxu0 0.0
    %659 = vmatprep.subr.mxu0 0.0
    %660 = vmatpush1.msra.mxu0 0.0
    %661 = vmatprep.subr.mxu0 0.0
    %662 = vmatpush1.msra.mxu0 0.0
    %663 = vmatprep.subr.mxu0 0.0
    %664 = vmatpush1.msra.mxu0 %v179
    %665 = vmatprep.subr.mxu0 0.0
    %666 = vmatpush1.msra.mxu0 %v178
    %667 = vmatprep.subr.mxu0 0.0
    %668 = vmatpush1.msra.mxu0 %v177
    %669 = vmatprep.subr.mxu0 0.0
    %670 = vmatpush1.msra.mxu0 %v176
    %671 = vmatprep.subr.mxu0 0.0
    %672 = vmatpush2.msra.mxu0 0.0
    %673 = vmatprep.subr.mxu0 0.0
    %674 = vmatpush2.msra.mxu0 0.0
    %675 = vmatprep.subr.mxu0 0.0
    %676 = vmatpush2.msra.mxu0 0.0
    %677 = vmatprep.subr.mxu0 0.0
    %678 = vmatpush2.msra.mxu0 0.0
    %679 = vmatprep.subr.mxu0 0.0
    %680 = vmatpush2.msra.mxu0 0.0
    %681 = vmatprep.subr.mxu0 0.0
    %682 = vmatpush2.msra.mxu0 0.0
    %683 = vmatprep.subr.mxu0 0.0
    %684 = vmatpush2.msra.mxu0 0.0
    %685 = vmatprep.subr.mxu0 0.0
    %686 = vmatpush2.msra.mxu0 0.0
    %687 = vmatprep.subr.mxu0 0.0
    %688 = vmatpush2.msra.mxu0 0.0
    %689 = vmatprep.subr.mxu0 0.0
    %690 = vmatpush2.msra.mxu0 0.0
    %691 = vmatprep.subr.mxu0 0.0
    %692 = vmatpush2.msra.mxu0 0.0
    %693 = vmatprep.subr.mxu0 0.0
    %694 = vmatpush2.msra.mxu0 0.0
    %695 = vmatprep.subr.mxu0 0.0
    %696 = vmatpush2.msra.mxu0 0.0
    %697 = vmatprep.subr.mxu0 0.0
    %698 = vmatpush2.msra.mxu0 0.0
    %699 = vmatprep.subr.mxu0 0.0
    %700 = vmatpush2.msra.mxu0 0.0
    %701 = vmatprep.subr.mxu0 0.0
    %702 = vmatpush2.msra.mxu0 0.0
    %703 = vmatprep.mubr.f32.mxu0 0.0
    %704 = vmatmul.mubr.f32.gmra.mxu0 %v637
    %v705 = vpop.f32.mrf.mxu0
    %v706 = vadd.f32 0.0, %v705
    %v707 = vpop.f32.mrf.mxu0
    %708 = vdwg.mxu0
    %v709 = vadd.f32 %v168, %v706
    %v710 = vtanh.pop %v709
    %711 = vst.msk [vmem:[#allocation2 + $0x30] sm:$0xff] %vm46, %v710
    %v713 = vsel %vm46, %v710, 0
    %715 = vmatprep.subr.mxu0 0.0
    %716 = vmatpush1.msra.mxu0 0.0
    %717 = vmatprep.subr.mxu0 0.0
    %718 = vmatpush1.msra.mxu0 0.0
    %719 = vmatprep.subr.mxu0 0.0
    %720 = vmatpush1.msra.mxu0 0.0
    %721 = vmatprep.subr.mxu0 0.0
    %722 = vmatpush1.msra.mxu0 0.0
    %723 = vmatprep.subr.mxu0 0.0
    %724 = vmatpush1.msra.mxu0 0.0
    %725 = vmatprep.subr.mxu0 0.0
    %726 = vmatpush1.msra.mxu0 0.0
    %727 = vmatprep.subr.mxu0 0.0
    %728 = vmatpush1.msra.mxu0 0.0
    %729 = vmatprep.subr.mxu0 0.0
    %730 = vmatpush1.msra.mxu0 0.0
    %731 = vmatprep.subr.mxu0 0.0
    %732 = vmatpush1.msra.mxu0 0.0
    %733 = vmatprep.subr.mxu0 0.0
    %734 = vmatpush1.msra.mxu0 0.0
    %735 = vmatprep.subr.mxu0 0.0
    %736 = vmatpush1.msra.mxu0 0.0
    %737 = vmatprep.subr.mxu0 0.0
    %738 = vmatpush1.msra.mxu0 0.0
    %739 = vmatprep.subr.mxu0 0.0
    %740 = vmatpush1.msra.mxu0 %v179
    %741 = vmatprep.subr.mxu0 0.0
    %742 = vmatpush1.msra.mxu0 %v178
    %743 = vmatprep.subr.mxu0 0.0
    %744 = vmatpush1.msra.mxu0 %v177
    %745 = vmatprep.subr.mxu0 0.0
    %746 = vmatpush1.msra.mxu0 %v176
    %747 = vmatprep.subr.mxu0 0.0
    %748 = vmatpush2.msra.mxu0 0.0
    %749 = vmatprep.subr.mxu0 0.0
    %750 = vmatpush2.msra.mxu0 0.0
    %751 = vmatprep.subr.mxu0 0.0
    %752 = vmatpush2.msra.mxu0 0.0
    %753 = vmatprep.subr.mxu0 0.0
    %754 = vmatpush2.msra.mxu0 0.0
    %755 = vmatprep.subr.mxu0 0.0
    %756 = vmatpush2.msra.mxu0 0.0
    %757 = vmatprep.subr.mxu0 0.0
    %758 = vmatpush2.msra.mxu0 0.0
    %759 = vmatprep.subr.mxu0 0.0
    %760 = vmatpush2.msra.mxu0 0.0
    %761 = vmatprep.subr.mxu0 0.0
    %762 = vmatpush2.msra.mxu0 0.0
    %763 = vmatprep.subr.mxu0 0.0
    %764 = vmatpush2.msra.mxu0 0.0
    %765 = vmatprep.subr.mxu0 0.0
    %766 = vmatpush2.msra.mxu0 0.0
    %767 = vmatprep.subr.mxu0 0.0
    %768 = vmatpush2.msra.mxu0 0.0
    %769 = vmatprep.subr.mxu0 0.0
    %770 = vmatpush2.msra.mxu0 0.0
    %771 = vmatprep.subr.mxu0 0.0
    %772 = vmatpush2.msra.mxu0 0.0
    %773 = vmatprep.subr.mxu0 0.0
    %774 = vmatpush2.msra.mxu0 0.0
    %775 = vmatprep.subr.mxu0 0.0
    %776 = vmatpush2.msra.mxu0 0.0
    %777 = vmatprep.subr.mxu0 0.0
    %778 = vmatpush2.msra.mxu0 0.0
    %779 = vmatprep.mubr.f32.mxu0 0.0
    %780 = vmatmul.mubr.f32.gmra.mxu0 %v713
    %v781 = vpop.f32.mrf.mxu0
    %v782 = vadd.f32 0.0, %v781
    %v783 = vpop.f32.mrf.mxu0
    %784 = vdwg.mxu0
    %v785 = vadd.f32 %v173, %v782
    %v786 = vtanh.pop %v785
    %787 = vst.msk [vmem:[#allocation2 + $0x38] sm:$0xff] %vm46, %v786
    %v788 = vld [vmem:[#allocation2] sm:$0xff]
    %v789 = vld [vmem:[#allocation2 + $0x8] sm:$0xff]
    %v790 = vld [vmem:[#allocation2 + $0x10] sm:$0xff]
    %v791 = vld [vmem:[#allocation2 + $0x18] sm:$0xff]
    %v792 = vld [vmem:[#allocation2 + $0x20] sm:$0xff]
    %v793 = vld [vmem:[#allocation2 + $0x28] sm:$0xff]
    %v794 = vld [vmem:[#allocation2 + $0x30] sm:$0xff]
    %v795 = vld [vmem:[#allocation2 + $0x38] sm:$0xff]
    %v796 = vld [vmem:[%s4] sm:$0xff]
    %v797 = vld [vmem:[%s4 + $0x8] sm:$0xff]
    %v798 = vld [vmem:[%s4 + $0x10] sm:$0xff]
    %v799 = vld [vmem:[%s4 + $0x18] sm:$0xff]
    %v800 = vld [vmem:[%s5] sm:$0x1]
    %v802 = vlaneseq
    %v803 = vshrl.u32 %v802, 7
    %v804 = vsub.s32 0, %v803
    %v805 = vrot.slane %v800, %v804
    %v808 = vsel %vm46, %v788, 0
    %v811 = vsel %vm46, %v789, 0
    %v814 = vsel %vm46, %v790, 0
    %v817 = vsel %vm46, %v791, 0
    %v820 = vsel %vm46, %v792, 0
    %v823 = vsel %vm46, %v793, 0
    %v826 = vsel %vm46, %v794, 0
    %v829 = vsel %vm46, %v795, 0
    %831 = vmatprep.subr.mxu0 0.0
    %832 = vmatpush1.msra.mxu0 0.0
    %833 = vmatprep.subr.mxu0 0.0
    %834 = vmatpush1.msra.mxu0 0.0
    %835 = vmatprep.subr.mxu0 0.0
    %836 = vmatpush1.msra.mxu0 0.0
    %837 = vmatprep.subr.mxu0 0.0
    %838 = vmatpush1.msra.mxu0 0.0
    %839 = vmatprep.subr.mxu0 0.0
    %840 = vmatpush1.msra.mxu0 0.0
    %841 = vmatprep.subr.mxu0 0.0
    %842 = vmatpush1.msra.mxu0 0.0
    %843 = vmatprep.subr.mxu0 0.0
    %844 = vmatpush1.msra.mxu0 0.0
    %845 = vmatprep.subr.mxu0 0.0
    %846 = vmatpush1.msra.mxu0 0.0
    %847 = vmatprep.subr.mxu0 0.0
    %848 = vmatpush1.msra.mxu0 0.0
    %849 = vmatprep.subr.mxu0 0.0
    %850 = vmatpush1.msra.mxu0 0.0
    %851 = vmatprep.subr.mxu0 0.0
    %852 = vmatpush1.msra.mxu0 0.0
    %853 = vmatprep.subr.mxu0 0.0
    %854 = vmatpush1.msra.mxu0 0.0
    %855 = vmatprep.subr.mxu0 0.0
    %856 = vmatpush1.msra.mxu0 %v799
    %857 = vmatprep.subr.mxu0 0.0
    %858 = vmatpush1.msra.mxu0 %v798
    %859 = vmatprep.subr.mxu0 0.0
    %860 = vmatpush1.msra.mxu0 %v797
    %861 = vmatprep.subr.mxu0 0.0
    %862 = vmatpush1.msra.mxu0 %v796
    %863 = vmatprep.subr.mxu0 0.0
    %864 = vmatpush2.msra.mxu0 0.0
    %865 = vmatprep.subr.mxu0 0.0
    %866 = vmatpush2.msra.mxu0 0.0
    %867 = vmatprep.subr.mxu0 0.0
    %868 = vmatpush2.msra.mxu0 0.0
    %869 = vmatprep.subr.mxu0 0.0
    %870 = vmatpush2.msra.mxu0 0.0
    %871 = vmatprep.subr.mxu0 0.0
    %872 = vmatpush2.msra.mxu0 0.0
    %873 = vmatprep.subr.mxu0 0.0
    %874 = vmatpush2.msra.mxu0 0.0
    %875 = vmatprep.subr.mxu0 0.0
    %876 = vmatpush2.msra.mxu0 0.0
    %877 = vmatprep.subr.mxu0 0.0
    %878 = vmatpush2.msra.mxu0 0.0
    %879 = vmatprep.subr.mxu0 0.0
    %880 = vmatpush2.msra.mxu0 0.0
    %881 = vmatprep.subr.mxu0 0.0
    %882 = vmatpush2.msra.mxu0 0.0
    %883 = vmatprep.subr.mxu0 0.0
    %884 = vmatpush2.msra.mxu0 0.0
    %885 = vmatprep.subr.mxu0 0.0
    %886 = vmatpush2.msra.mxu0 0.0
    %887 = vmatprep.subr.mxu0 0.0
    %888 = vmatpush2.msra.mxu0 0.0
    %889 = vmatprep.subr.mxu0 0.0
    %890 = vmatpush2.msra.mxu0 0.0
    %891 = vmatprep.subr.mxu0 0.0
    %892 = vmatpush2.msra.mxu0 0.0
    %893 = vmatprep.subr.mxu0 0.0
    %894 = vmatpush2.msra.mxu0 0.0
    %895 = vmatprep.mubr.f32.mxu0 0.0
    %896 = vmatmul.mubr.f32.gmra.mxu0 %v808
    %v897 = vpop.f32.mrf.mxu0
    %v898 = vadd.f32 %v805, %v897
    %v899 = vpop.f32.mrf.mxu0
    %900 = vmatprep.mubr.f32.mxu0 0.0
    %901 = vmatmul.mubr.f32.gmra.mxu0 %v811
    %v902 = vpop.f32.mrf.mxu0
    %v903 = vadd.f32 %v805, %v902
    %v904 = vpop.f32.mrf.mxu0
    %905 = vmatprep.mubr.f32.mxu0 0.0
    %906 = vmatmul.mubr.f32.gmra.mxu0 %v814
    %v907 = vpop.f32.mrf.mxu0
    %v908 = vadd.f32 %v805, %v907
    %v909 = vpop.f32.mrf.mxu0
    %910 = vmatprep.mubr.f32.mxu0 0.0
    %911 = vmatmul.mubr.f32.gmra.mxu0 %v817
    %v912 = vpop.f32.mrf.mxu0
    %v913 = vadd.f32 %v805, %v912
    %v914 = vpop.f32.mrf.mxu0
    %915 = vmatprep.mubr.f32.mxu0 0.0
    %916 = vmatmul.mubr.f32.gmra.mxu0 %v820
    %v917 = vpop.f32.mrf.mxu0
    %v918 = vadd.f32 %v805, %v917
    %v919 = vpop.f32.mrf.mxu0
    %920 = vmatprep.mubr.f32.mxu0 0.0
    %921 = vmatmul.mubr.f32.gmra.mxu0 %v823
    %v922 = vpop.f32.mrf.mxu0
    %v923 = vadd.f32 %v805, %v922
    %v924 = vpop.f32.mrf.mxu0
    %925 = vmatprep.mubr.f32.mxu0 0.0
    %926 = vmatmul.mubr.f32.gmra.mxu0 %v826
    %v927 = vpop.f32.mrf.mxu0
    %v928 = vadd.f32 %v805, %v927
    %v929 = vpop.f32.mrf.mxu0
    %930 = vmatprep.mubr.f32.mxu0 0.0
    %931 = vmatmul.mubr.f32.gmra.mxu0 %v829
    %v932 = vpop.f32.mrf.mxu0
    %v933 = vadd.f32 %v805, %v932
    %v934 = vpop.f32.mrf.mxu0
    %935 = vdwg.mxu0
    %936 = vst [vmem:[#allocation3] sm:$0xff] %v898
    %937 = vst [vmem:[#allocation3 + $0x8] sm:$0xff] %v903
    %938 = vst [vmem:[#allocation3 + $0x10] sm:$0xff] %v908
    %939 = vst [vmem:[#allocation3 + $0x18] sm:$0xff] %v913
    %940 = vst [vmem:[#allocation3 + $0x20] sm:$0xff] %v918
    %941 = vst [vmem:[#allocation3 + $0x28] sm:$0xff] %v923
    %942 = vst [vmem:[#allocation3 + $0x30] sm:$0xff] %v928
    %943 = vst [vmem:[#allocation3 + $0x38] sm:$0xff] %v933
    %944 = vst.msk [vmem:[#allocation5] sm:$0xff] %vm46, %v786
    // Predicated region
    $region26: #{tpu_custom_call.1} parent=1 // pred_check
      _
    $region27: #{tpu_custom_call.1} parent=1 // pred_check_branch
      %946 = sbr.rel (0) target = $region29
    $region28: #{tpu_custom_call.1} parent=1 // pred_region
      %s948 = ssub.s32 1024, 1024
      %949 = vsyncadd [#allocation4], %s948
      %s950 = sshll.u32 [#allocation3], 4
      %s951 = int_to_ptr.vmem [resolvable:$true] %s950
      %956 = dma.vmem_to_hbm [thread:$0]  %s951, 1024, %s6, [#allocation4], 128, 128, 8
    $region29: #{tpu_custom_call.1} parent=1 // pred_fallthru
      _
    // Predicated region
    $region30: #{tpu_custom_call.1} parent=1 // pred_check
      _
    $region31: #{tpu_custom_call.1} parent=1 // pred_check_branch
      %958 = sbr.rel (0) target = $region33
    $region32: #{tpu_custom_call.1} parent=1 // pred_region
      %s960 = ssub.s32 128, 128
      %961 = vsyncadd [#allocation6], %s960
      %s963 = sshll.u32 [#allocation5], 4
      %s964 = int_to_ptr.vmem [resolvable:$true] %s963
      %966 = dma.vmem_to_hbm [thread:$0]  %s964, 128, %s7, [#allocation6]
    $region33: #{tpu_custom_call.1} parent=1 // pred_fallthru
      _
    // Predicated region
    $region34: #{tpu_custom_call.1} parent=1 // pred_check
      _
    $region35: #{tpu_custom_call.1} parent=1 // pred_check_branch
      %968 = sbr.rel (0) target = $region37
    $region36: #{tpu_custom_call.1} parent=1 // pred_region
      %969 = dma.done [#allocation4], 1024
    $region37: #{tpu_custom_call.1} parent=1 // pred_fallthru
      _
    // Predicated region
    $region38: #{tpu_custom_call.1} parent=1 // pred_check
      _
    $region39: #{tpu_custom_call.1} parent=1 // pred_check_branch
      %971 = sbr.rel (0) target = $region41
    $region40: #{tpu_custom_call.1} parent=1 // pred_region
      %972 = dma.done [#allocation6], 128
    $region41: #{tpu_custom_call.1} parent=1 // pred_fallthru
      _
    %973 = vsyncpa [#allocation4], 1
    %974 = vsyncpa [#allocation6], 1

</llo_original>
